<compile_context>
chip_gen: v5e
topology: v5e:2x2
jax: 0.10.0
libtpu: 0.0.40
codegen_flags: <defaults>
</compile_context>

<pallas_src>
import jax
import jax.numpy as jnp
from jax.experimental import pallas as pl
from jax.experimental.pallas import tpu as pltpu


# ---------------------------------------------------------------------------
# Kernel 1 (hot loop): conv-as-matmul + ReLU + partial global-average-pool sums
# ---------------------------------------------------------------------------
def _make_conv_pool_kernel(k_real, hw, tile_rows):
    ragged = (hw % tile_rows) != 0   # compile-time: do padded rows exist?

    def kernel(patches_ref, convw_ref, pooled_ref, acc_ref, stage_ref):
        ri = pl.program_id(1)

        @pl.when(ri == 0)
        def _init():
            acc_ref[...] = jnp.zeros_like(acc_ref)
            # Staging buffer: lanes [0, k_real) get patch data each step, lane k_real
            # is a constant 1.0 (folds conv bias into the matmul), rest stay zero.
            lane = jax.lax.broadcasted_iota(jnp.int32, stage_ref.shape, 1)
            stage_ref[...] = jnp.where(lane == k_real, 1.0, 0.0).astype(stage_ref.dtype)

        # Only the real 9*C lanes are streamed from HBM; pad to 128 on-chip.
        stage_ref[:, :k_real] = patches_ref[...]

        # conv as matmul (bias included via the folded ones-column): bf16 -> f32 acc.
        feat = jnp.dot(stage_ref[...], convw_ref[...],
                       preferred_element_type=jnp.float32)
        feat = jnp.maximum(feat, 0.0)                       # ReLU (f32)

        if ragged:
            # Mask out rows past H*W (zero-padded tail tile) before pooling.
            row = jax.lax.broadcasted_iota(jnp.int32, feat.shape, 0)
            feat = jnp.where(row + ri * tile_rows < hw, feat, 0.0)

        # Partial global-average-pool: per-tile row sums (1/(H*W) applied later, f32).
        acc_ref[...] += jnp.sum(feat, axis=0, keepdims=True)

        @pl.when(ri == pl.num_programs(1) - 1)
        def _fin():
            pooled_ref[...] = acc_ref[...]

    return kernel


# ---------------------------------------------------------------------------
# Kernel 2 (tiny, batched): embedding fc + ReLU + classifier, all rows at once
# ---------------------------------------------------------------------------
def _make_head_kernel(inv_hw):
    def kernel(pooled_ref, fcw_ref, fcb_ref, clsw_ref, clsb_ref,
               logits_ref, embed_ref):
        pooled = pooled_ref[...] * inv_hw                   # f32 mean (GAP)
        # EmbeddingNet fc: Linear(in_feats, feat_dim)
        embed = jnp.dot(pooled, fcw_ref[...],
                        preferred_element_type=jnp.float32) + fcb_ref[...]
        embed_ref[...] = embed
        # SoftmaxNet head: logits = classifier(relu(embed))
        hidden = jnp.maximum(embed, 0.0)
        logits_ref[...] = jnp.dot(hidden, clsw_ref[...],
                                  preferred_element_type=jnp.float32) + clsb_ref[...]
    return kernel


# ---------------------------------------------------------------------------
# Wrapper helpers
# ---------------------------------------------------------------------------
def _round_up(n, m):
    return ((n + m - 1) // m) * m


def _im2col_3x3_same(x_nhwc):
    """3x3, stride 1, padding 1 patches. Returns [B, H*W, 9*C] (input dtype)."""
    b, h, w, c = x_nhwc.shape
    xp = jnp.pad(x_nhwc, ((0, 0), (1, 1), (1, 1), (0, 0)))
    cols = [xp[:, dh:dh + h, dw:dw + w, :] for dh in range(3) for dw in range(3)]
    return jnp.stack(cols, axis=-2).reshape(b, h * w, 9 * c)


@jax.jit
def softmaxnet_forward(x_nchw, params):
    """Returns (logits, embed), matching SoftmaxNet.forward."""
    conv_w, conv_b, fc_w, fc_b, cls_w, cls_b = params
    b, c, h, w = x_nchw.shape
    hw = h * w
    k = 9 * c
    cf = conv_w.shape[1]
    feat_dim = fc_w.shape[1]
    num_classes = cls_w.shape[1]

    stage_k = _round_up(k + 1, 128)          # +1 column: folded conv bias
    cf_pad = _round_up(cf, 128)
    feat_pad = _round_up(feat_dim, 128)
    cls_pad = _round_up(num_classes, 128)

    # Large row tiles amortize grid-step overhead; cdiv tiling with masked tail.
    tile_rows = min(_round_up(hw, 8), 2048)
    num_r = pl.cdiv(hw, tile_rows)
    hw_pad = num_r * tile_rows

    # Cast to bf16 BEFORE the 9x im2col expansion (halves wrapper HBM writes).
    x_nhwc = jnp.transpose(x_nchw, (0, 2, 3, 1)).astype(jnp.bfloat16)
    patches = _im2col_3x3_same(x_nhwc)                      # (B, HW, 9C) bf16, real K
    if hw_pad != hw:
        patches = jnp.pad(patches, ((0, 0), (0, hw_pad - hw), (0, 0)))

    # conv weights with the bias appended as an extra K row (matches ones column).
    conv_wb = jnp.concatenate([conv_w, conv_b.reshape(1, cf)], axis=0)  # (K+1, cf)
    conv_w_p = jnp.pad(conv_wb,
                       ((0, stage_k - (k + 1)), (0, cf_pad - cf))).astype(jnp.bfloat16)

    # Head weights stay f32 (tiny; loaded once), zero-padded to lane-dense widths.
    fc_w_p = jnp.pad(fc_w, ((0, cf_pad - cf), (0, feat_pad - feat_dim)))
    fc_b_p = jnp.pad(fc_b, ((0, 0), (0, feat_pad - feat_dim)))
    cls_w_p = jnp.pad(cls_w, ((0, feat_pad - feat_dim), (0, cls_pad - num_classes)))
    cls_b_p = jnp.pad(cls_b, ((0, 0), (0, cls_pad - num_classes)))

    # ---- Pass 1: conv + ReLU + pooled sums (HBM-bound hot loop) ----
    pooled = pl.pallas_call(
        _make_conv_pool_kernel(k, hw, tile_rows),
        out_shape=jax.ShapeDtypeStruct((b, 1, cf_pad), jnp.float32),
        grid_spec=pltpu.PrefetchScalarGridSpec(
            num_scalar_prefetch=0,
            grid=(b, num_r),
            in_specs=[
                # streamed patch tiles at their REAL last dim (full-dim block)
                pl.BlockSpec((None, tile_rows, k), lambda bi, ri: (bi, ri, 0)),
                # conv weights (+folded bias): constant index -> VMEM resident
                pl.BlockSpec((stage_k, cf_pad), lambda bi, ri: (0, 0)),
            ],
            out_specs=pl.BlockSpec((None, 1, cf_pad), lambda bi, ri: (bi, 0, 0)),
            scratch_shapes=[
                pltpu.VMEM((1, cf_pad), jnp.float32),            # pooled sums
                pltpu.VMEM((tile_rows, stage_k), jnp.bfloat16),  # K-pad staging
            ],
        ),
        compiler_params=pltpu.CompilerParams(
            dimension_semantics=("parallel", "arbitrary"),
            vmem_limit_bytes=48 * 1024 * 1024,   # fits v7x's 64 MiB VMEM with headroom
        ),
    )(patches, conv_w_p)

    # ---- Pass 2: batched fc + ReLU + classifier (tiny, f32) ----
    pooled2d = pooled.reshape(b, cf_pad)
    logits_p, embed_p = pl.pallas_call(
        _make_head_kernel(1.0 / hw),
        out_shape=(jax.ShapeDtypeStruct((b, cls_pad), jnp.float32),
                   jax.ShapeDtypeStruct((b, feat_pad), jnp.float32)),
        in_specs=[pl.BlockSpec(memory_space=pltpu.MemorySpace.VMEM)] * 5,
        out_specs=(pl.BlockSpec(memory_space=pltpu.MemorySpace.VMEM),
                   pl.BlockSpec(memory_space=pltpu.MemorySpace.VMEM)),
    )(pooled2d, fc_w_p, fc_b_p, cls_w_p, cls_b_p)

    logits = logits_p[:, :num_classes]
    embed = embed_p[:, :feat_dim]
    return logits, embed


# ---------------------------------------------------------------------------
# Pure-JAX reference (f32) for validation
# ---------------------------------------------------------------------------
def softmaxnet_reference(x_nchw, params):
    conv_w, conv_b, fc_w, fc_b, cls_w, cls_b = params
    x_nhwc = jnp.transpose(x_nchw, (0, 2, 3, 1))
    patches = _im2col_3x3_same(x_nhwc)                      # (B, HW, 9C) f32
    feat = jnp.maximum(jnp.einsum('bpk,kf->bpf', patches, conv_w) + conv_b, 0.0)
    pooled = feat.mean(axis=1)                              # global avg pool
    embed = pooled @ fc_w + fc_b
    logits = jnp.maximum(embed, 0.0) @ cls_w + cls_b
    return logits, embed


def init_params(key, c_in, conv_feats, feat_dim, num_classes):
    ks = jax.random.split(key, 6)
    conv_w = jax.random.normal(ks[0], (9 * c_in, conv_feats), jnp.float32) * 0.1
    conv_b = jax.random.normal(ks[1], (1, conv_feats), jnp.float32) * 0.01
    fc_w = jax.random.normal(ks[2], (conv_feats, feat_dim), jnp.float32) * 0.1
    fc_b = jax.random.normal(ks[3], (1, feat_dim), jnp.float32) * 0.01
    cls_w = jax.random.normal(ks[4], (feat_dim, num_classes), jnp.float32) * 0.1
    cls_b = jax.random.normal(ks[5], (1, num_classes), jnp.float32) * 0.01
    return conv_w, conv_b, fc_w, fc_b, cls_w, cls_b


if __name__ == "__main__":
    key = jax.random.PRNGKey(0)
    k_x, k_p = jax.random.split(key)

    B, C_IN, H, W = 2, 3, 16, 16        # small image batch (NCHW, like PyTorch)
    CONV_FEATS = 32                     # stand-in backbone feature width (in_feats)
    FEAT_DIM = 16                       # EmbeddingNet feat_dim
    NUM_CLASSES = 8                     # SoftmaxNet num_classes

    x = jax.random.normal(k_x, (B, C_IN, H, W), jnp.float32)
    params = init_params(k_p, C_IN, CONV_FEATS, FEAT_DIM, NUM_CLASSES)

    logits, embed = softmaxnet_forward(x, params)
    jax.block_until_ready((logits, embed))

    assert logits.shape == (B, NUM_CLASSES) and logits.dtype == jnp.float32
    assert embed.shape == (B, FEAT_DIM) and embed.dtype == jnp.float32

    ref_logits, ref_embed = softmaxnet_reference(x, params)
    assert jnp.allclose(logits, ref_logits, rtol=5e-2, atol=5e-2)
    assert jnp.allclose(embed, ref_embed, rtol=5e-2, atol=5e-2)

    print("KERNEL_OK")
</pallas_src>

<mosaic_0001>
module attributes {stable_mosaic.version = 11 : i64} {
  func.func @kernel(%arg0: i32, %arg1: i32, %arg2: memref<1x256x27xbf16, #tpu.memory_space<vmem>>, %arg3: memref<128x128xbf16, #tpu.memory_space<vmem>>, %arg4: memref<1x1x128xf32, #tpu.memory_space<vmem>>, %arg5: memref<1x128xf32, #tpu.memory_space<vmem>>, %arg6: memref<256x128xbf16, #tpu.memory_space<vmem>>) attributes {dimension_semantics = [#tpu.dimension_semantics<parallel>, #tpu.dimension_semantics<arbitrary>], iteration_bounds = array<i64: 2, 1>, scalar_prefetch = 0 : i64, scratch_operands = 2 : i64, tpu.core_type = #tpu.core_type<tc>, window_params = [{transform_indices = @transform_0, window_bounds = array<i64: 1, 256, 27>}, {pipeline_mode = #tpu.pipeline_mode<synchronous>, transform_indices = @transform_1, window_bounds = array<i64: 128, 128>}, {transform_indices = @transform_2, window_bounds = array<i64: 1, 1, 128>}]} {
    %c0_i32 = arith.constant 0 : i32
    %0 = arith.cmpi eq, %arg1, %c0_i32 : i32
    %1 = arith.extui %0 : i1 to i32
    %c0_i32_0 = arith.constant 0 : i32
    %2 = arith.cmpi ne, %1, %c0_i32_0 : i32
    scf.if %2 {
      %cst_17 = arith.constant 0.000000e+00 : f32
      %19 = vector.broadcast %cst_17 : f32 to vector<1x128xf32>
      %c0_18 = arith.constant 0 : index
      %c0_19 = arith.constant 0 : index
      %20 = vector.load %arg5[%c0_18, %c0_19] : memref<1x128xf32, #tpu.memory_space<vmem>>, vector<1x128xf32>
      tpu.vector_store %arg5[%c0_18, %c0_19], %19 {strides = array<i32>} : memref<1x128xf32, #tpu.memory_space<vmem>>, vector<1x128xf32>,
      %21 = tpu.iota {dimensions = array<i32: 1>} : vector<256x128xi32>
      %c27_i32 = arith.constant 27 : i32
      %22 = vector.broadcast %c27_i32 : i32 to vector<256x128xi32>
      %23 = arith.cmpi eq, %21, %22 : vector<256x128xi32>
      %cst_20 = arith.constant 1.000000e+00 : f32
      %cst_21 = arith.constant 0.000000e+00 : f32
      %24 = vector.broadcast %cst_20 : f32 to vector<256x128xf32>
      %25 = vector.broadcast %cst_21 : f32 to vector<256x128xf32>
      %26 = arith.select %23, %24, %25 : vector<256x128xi1>, vector<256x128xf32>
      %27 = arith.truncf %26 : vector<256x128xf32> to vector<256x128xbf16>
      %c0_22 = arith.constant 0 : index
      %c0_23 = arith.constant 0 : index
      %28 = vector.load %arg6[%c0_22, %c0_23] : memref<256x128xbf16, #tpu.memory_space<vmem>>, vector<256x128xbf16>
      tpu.vector_store %arg6[%c0_22, %c0_23], %27 {strides = array<i32>} : memref<256x128xbf16, #tpu.memory_space<vmem>>, vector<256x128xbf16>,
    } else {
    }
    %c0 = arith.constant 0 : index
    %c0_1 = arith.constant 0 : index
    %c0_2 = arith.constant 0 : index
    %3 = vector.load %arg2[%c0, %c0_1, %c0_2] : memref<1x256x27xbf16, #tpu.memory_space<vmem>>, vector<1x256x27xbf16>
    %4 = vector.shape_cast %3 : vector<1x256x27xbf16> to vector<256x27xbf16>
    %c0_3 = arith.constant 0 : index
    %c0_4 = arith.constant 0 : index
    %5 = vector.load %arg6[%c0_3, %c0_4] : memref<256x128xbf16, #tpu.memory_space<vmem>>, vector<256x27xbf16>
    tpu.vector_store %arg6[%c0_3, %c0_4], %4 {strides = array<i32>} : memref<256x128xbf16, #tpu.memory_space<vmem>>, vector<256x27xbf16>,
    %c0_5 = arith.constant 0 : index
    %c0_6 = arith.constant 0 : index
    %6 = vector.load %arg6[%c0_5, %c0_6] : memref<256x128xbf16, #tpu.memory_space<vmem>>, vector<256x128xbf16>
    %c0_7 = arith.constant 0 : index
    %c0_8 = arith.constant 0 : index
    %7 = vector.load %arg3[%c0_7, %c0_8] : memref<128x128xbf16, #tpu.memory_space<vmem>>, vector<128x128xbf16>
    %cst = arith.constant dense<0.000000e+00> : vector<256x128xf32>
    %8 = tpu.matmul %6, %7, %cst {dimension_numbers = #tpu.dot_dimension_numbers<[1], [0], [0], [1], [0, 0, 1, 1], [], []>} : vector<256x128xbf16>, vector<128x128xbf16>, vector<256x128xf32> -> vector<256x128xf32>
    %cst_9 = arith.constant 0.000000e+00 : f32
    %9 = vector.broadcast %cst_9 : f32 to vector<256x128xf32>
    %10 = arith.maximumf %8, %9 : vector<256x128xf32>
    %c0_10 = arith.constant 0 : index
    %c0_11 = arith.constant 0 : index
    %11 = vector.load %arg5[%c0_10, %c0_11] : memref<1x128xf32, #tpu.memory_space<vmem>>, vector<1x128xf32>
    %cst_12 = arith.constant dense<0.000000e+00> : vector<128xf32>
    %12 = vector.multi_reduction <add>, %10, %cst_12 [0] : vector<256x128xf32> to vector<128xf32>
    %13 = vector.shape_cast %12 : vector<128xf32> to vector<1x128xf32>
    %14 = arith.addf %11, %13 : vector<1x128xf32>
    %c0_13 = arith.constant 0 : index
    %c0_14 = arith.constant 0 : index
    %15 = vector.load %arg5[%c0_13, %c0_14] : memref<1x128xf32, #tpu.memory_space<vmem>>, vector<1x128xf32>
    tpu.vector_store %arg5[%c0_13, %c0_14], %14 {strides = array<i32>} : memref<1x128xf32, #tpu.memory_space<vmem>>, vector<1x128xf32>,
    %c0_i32_15 = arith.constant 0 : i32
    %16 = arith.cmpi eq, %arg1, %c0_i32_15 : i32
    %17 = arith.extui %16 : i1 to i32
    %c0_i32_16 = arith.constant 0 : i32
    %18 = arith.cmpi ne, %17, %c0_i32_16 : i32
    scf.if %18 {
      %c0_17 = arith.constant 0 : index
      %c0_18 = arith.constant 0 : index
      %19 = vector.load %arg5[%c0_17, %c0_18] : memref<1x128xf32, #tpu.memory_space<vmem>>, vector<1x128xf32>
      %c0_19 = arith.constant 0 : index
      %c0_20 = arith.constant 0 : index
      %c0_21 = arith.constant 0 : index
      %20 = vector.load %arg4[%c0_19, %c0_20, %c0_21] : memref<1x1x128xf32, #tpu.memory_space<vmem>>, vector<1x1x128xf32>
      %21 = vector.shape_cast %20 : vector<1x1x128xf32> to vector<1x128xf32>
      %22 = vector.shape_cast %19 : vector<1x128xf32> to vector<1x1x128xf32>
      tpu.vector_store %arg4[%c0_19, %c0_20, %c0_21], %22 {strides = array<i32>} : memref<1x1x128xf32, #tpu.memory_space<vmem>>, vector<1x1x128xf32>,
    } else {
    }
    return
  }
  func.func @transform_0(%arg0: i32, %arg1: i32) -> (i32, i32, i32) {
    %c0_i32 = arith.constant 0 : i32
    %c0_i32_0 = arith.constant 0 : i32
    return %arg0, %arg1, %c0_i32 : i32, i32, i32
  }
  func.func @transform_1(%arg0: i32, %arg1: i32) -> (i32, i32) {
    %c0_i32 = arith.constant 0 : i32
    %c0_i32_0 = arith.constant 0 : i32
    %c0_i32_1 = arith.constant 0 : i32
    return %c0_i32, %c0_i32_0 : i32, i32
  }
  func.func @transform_2(%arg0: i32, %arg1: i32) -> (i32, i32, i32) {
    %c0_i32 = arith.constant 0 : i32
    %c0_i32_0 = arith.constant 0 : i32
    %c0_i32_1 = arith.constant 0 : i32
    return %arg0, %c0_i32, %c0_i32_0 : i32, i32, i32
  }
}

module attributes {stable_mosaic.version = 11 : i64} {
  func.func @kernel(%arg0: memref<2x128xf32, #tpu.memory_space<vmem>>, %arg1: memref<128x128xf32, #tpu.memory_space<vmem>>, %arg2: memref<1x128xf32, #tpu.memory_space<vmem>>, %arg3: memref<128x128xf32, #tpu.memory_space<vmem>>, %arg4: memref<1x128xf32, #tpu.memory_space<vmem>>, %arg5: memref<2x128xf32, #tpu.memory_space<vmem>>, %arg6: memref<2x128xf32, #tpu.memory_space<vmem>>) attributes {dimension_semantics = [], scalar_prefetch = 0 : i64, scratch_operands = 0 : i64, tpu.core_type = #tpu.core_type<tc>} {
    %c0 = arith.constant 0 : index
    %c0_0 = arith.constant 0 : index
    %0 = vector.load %arg0[%c0, %c0_0] : memref<2x128xf32, #tpu.memory_space<vmem>>, vector<2x128xf32>
    %cst = arith.constant 3.906250e-03 : f32
    %1 = vector.broadcast %cst : f32 to vector<2x128xf32>
    %2 = arith.mulf %0, %1 : vector<2x128xf32>
    %c0_1 = arith.constant 0 : index
    %c0_2 = arith.constant 0 : index
    %3 = vector.load %arg1[%c0_1, %c0_2] : memref<128x128xf32, #tpu.memory_space<vmem>>, vector<128x128xf32>
    %cst_3 = arith.constant dense<0.000000e+00> : vector<2x128xf32>
    %4 = tpu.matmul %2, %3, %cst_3 {dimension_numbers = #tpu.dot_dimension_numbers<[1], [0], [0], [1], [0, 0, 1, 1], [], []>} : vector<2x128xf32>, vector<128x128xf32>, vector<2x128xf32> -> vector<2x128xf32>
    %c0_4 = arith.constant 0 : index
    %c0_5 = arith.constant 0 : index
    %5 = vector.load %arg2[%c0_4, %c0_5] : memref<1x128xf32, #tpu.memory_space<vmem>>, vector<1x128xf32>
    %6 = vector.broadcast %5 : vector<1x128xf32> to vector<2x128xf32>
    %7 = arith.addf %4, %6 : vector<2x128xf32>
    %c0_6 = arith.constant 0 : index
    %c0_7 = arith.constant 0 : index
    %8 = vector.load %arg6[%c0_6, %c0_7] : memref<2x128xf32, #tpu.memory_space<vmem>>, vector<2x128xf32>
    tpu.vector_store %arg6[%c0_6, %c0_7], %7 {strides = array<i32>} : memref<2x128xf32, #tpu.memory_space<vmem>>, vector<2x128xf32>,
    %cst_8 = arith.constant 0.000000e+00 : f32
    %9 = vector.broadcast %cst_8 : f32 to vector<2x128xf32>
    %10 = arith.maximumf %7, %9 : vector<2x128xf32>
    %c0_9 = arith.constant 0 : index
    %c0_10 = arith.constant 0 : index
    %11 = vector.load %arg3[%c0_9, %c0_10] : memref<128x128xf32, #tpu.memory_space<vmem>>, vector<128x128xf32>
    %cst_11 = arith.constant dense<0.000000e+00> : vector<2x128xf32>
    %12 = tpu.matmul %10, %11, %cst_11 {dimension_numbers = #tpu.dot_dimension_numbers<[1], [0], [0], [1], [0, 0, 1, 1], [], []>} : vector<2x128xf32>, vector<128x128xf32>, vector<2x128xf32> -> vector<2x128xf32>
    %c0_12 = arith.constant 0 : index
    %c0_13 = arith.constant 0 : index
    %13 = vector.load %arg4[%c0_12, %c0_13] : memref<1x128xf32, #tpu.memory_space<vmem>>, vector<1x128xf32>
    %14 = vector.broadcast %13 : vector<1x128xf32> to vector<2x128xf32>
    %15 = arith.addf %12, %14 : vector<2x128xf32>
    %c0_14 = arith.constant 0 : index
    %c0_15 = arith.constant 0 : index
    %16 = vector.load %arg5[%c0_14, %c0_15] : memref<2x128xf32, #tpu.memory_space<vmem>>, vector<2x128xf32>
    tpu.vector_store %arg5[%c0_14, %c0_15], %15 {strides = array<i32>} : memref<2x128xf32, #tpu.memory_space<vmem>>, vector<2x128xf32>,
    return
  }
}

</mosaic_0001>

<llo_original>
// kernel: softmaxnet_forward.3
$region0: #{softmaxnet_forward.3}
  #allocation0 [shape = 'u32[]', space=smem, size = 0x4, offset = 0x4, fixed_abs, tag = 'smem constant byte address 0x4 - core index']
  #allocation1 [shape = 'u32[72,128]{1,0:T(1,128)}', space=vmem, size = 0x9000, scoped, tag = 'internal scratch']
  %s0 = inlined_call_operand.vmem [shape: f32[2,128], index: 0, kind: input, shape index: {}]
  %s1 = inlined_call_operand.vmem [shape: f32[128,128], index: 1, kind: input, shape index: {}]
  %s2 = inlined_call_operand.vmem [shape: f32[1,128], index: 2, kind: input, shape index: {}]
  %s3 = inlined_call_operand.vmem [shape: f32[128,128], index: 3, kind: input, shape index: {}]
  %s4 = inlined_call_operand.vmem [shape: f32[1,128], index: 4, kind: input, shape index: {}]
  %s5 = inlined_call_operand.hbm [shape: f32[2,128], index: 5, kind: output, shape index: {0}]
  %s6 = inlined_call_operand.hbm [shape: f32[2,128], index: 6, kind: output, shape index: {1}]
  %7 = xla_tuple %s5, %s6
  %s8 = sld [smem:[#allocation0]]
  $region38: #{softmaxnet_forward.3} parent=0
    _
  %s10 = ssub.s32 1, %s8
  %s11 = scalar_select 0, %s10, %s8
  $region1: #{softmaxnet_forward.3} parent=0
    #allocation2 [shape = 'u8[1024]{0}', space=vmem, size = 0x400, scoped, tag = 'output window, operand 0, single buffered']
    #allocation3 [shape = 's32[1]{0}', space=sflag, size = 0x4, scoped, tag = 'scoped memory for softmaxnet_forward.3']
    #allocation4 [shape = 'u8[1024]{0}', space=vmem, size = 0x400, scoped, tag = 'output window, operand 1, single buffered']
    #allocation5 [shape = 's32[1]{0}', space=sflag, size = 0x4, scoped, tag = 'scoped memory for softmaxnet_forward.3']
    %12 = vsyncpa [#allocation3], 0
    %13 = vsyncpa [#allocation5], 0
    // Predicated region
    $region2: #{softmaxnet_forward.3} parent=1 // pred_check
      _
    $region3: #{softmaxnet_forward.3} parent=1 // pred_check_branch
      %15 = sbr.rel (0) target = $region5
    $region4: #{softmaxnet_forward.3} parent=1 // pred_region
      _
    $region5: #{softmaxnet_forward.3} parent=1 // pred_fallthru
      _
    // Predicated region
    $region6: #{softmaxnet_forward.3} parent=1 // pred_check
      _
    $region7: #{softmaxnet_forward.3} parent=1 // pred_check_branch
      %17 = sbr.rel (0) target = $region9
    $region8: #{softmaxnet_forward.3} parent=1 // pred_region
      _
    $region9: #{softmaxnet_forward.3} parent=1 // pred_fallthru
      _
    // Predicated region
    $region10: #{softmaxnet_forward.3} parent=1 // pred_check
      _
    $region11: #{softmaxnet_forward.3} parent=1 // pred_check_branch
      %19 = sbr.rel (0) target = $region13
    $region12: #{softmaxnet_forward.3} parent=1 // pred_region
      _
    $region13: #{softmaxnet_forward.3} parent=1 // pred_fallthru
      _
    // Predicated region
    $region14: #{softmaxnet_forward.3} parent=1 // pred_check
      _
    $region15: #{softmaxnet_forward.3} parent=1 // pred_check_branch
      %21 = sbr.rel (0) target = $region17
    $region16: #{softmaxnet_forward.3} parent=1 // pred_region
      _
    $region17: #{softmaxnet_forward.3} parent=1 // pred_fallthru
      _
    // Predicated region
    $region18: #{softmaxnet_forward.3} parent=1 // pred_check
      _
    $region19: #{softmaxnet_forward.3} parent=1 // pred_check_branch
      %23 = sbr.rel (0) target = $region21
    $region20: #{softmaxnet_forward.3} parent=1 // pred_region
      _
    $region21: #{softmaxnet_forward.3} parent=1 // pred_fallthru
      _
    %v24 = vld [vmem:[%s0] sm:$0x3]
    %v25 = vmul.f32 %v24, 0.00390625
    %v26 = vld [vmem:[%s1] sm:$0xff]
    %v27 = vld [vmem:[%s1 + $0x8] sm:$0xff]
    %v28 = vld [vmem:[%s1 + $0x10] sm:$0xff]
    %v29 = vld [vmem:[%s1 + $0x18] sm:$0xff]
    %v30 = vld [vmem:[%s1 + $0x20] sm:$0xff]
    %v31 = vld [vmem:[%s1 + $0x28] sm:$0xff]
    %v32 = vld [vmem:[%s1 + $0x30] sm:$0xff]
    %v33 = vld [vmem:[%s1 + $0x38] sm:$0xff]
    %v34 = vld [vmem:[%s1 + $0x40] sm:$0xff]
    %v35 = vld [vmem:[%s1 + $0x48] sm:$0xff]
    %v36 = vld [vmem:[%s1 + $0x50] sm:$0xff]
    %v37 = vld [vmem:[%s1 + $0x58] sm:$0xff]
    %v38 = vld [vmem:[%s1 + $0x60] sm:$0xff]
    %v39 = vld [vmem:[%s1 + $0x68] sm:$0xff]
    %v40 = vld [vmem:[%s1 + $0x70] sm:$0xff]
    %v41 = vld [vmem:[%s1 + $0x78] sm:$0xff]
    %v42 = vld [vmem:[%s2] sm:$0x1]
    %v44 = vperm.slane %v42, 0
    %46 = vmatpush.msra.mxu0 %v41
    %47 = vmatpush.msra.mxu0 %v40
    %48 = vmatpush.msra.mxu0 %v39
    %49 = vmatpush.msra.mxu0 %v38
    %50 = vmatpush.msra.mxu0 %v37
    %51 = vmatpush.msra.mxu0 %v36
    %52 = vmatpush.msra.mxu0 %v35
    %53 = vmatpush.msra.mxu0 %v34
    %54 = vmatpush.msra.mxu0 %v33
    %55 = vmatpush.msra.mxu0 %v32
    %56 = vmatpush.msra.mxu0 %v31
    %57 = vmatpush.msra.mxu0 %v30
    %58 = vmatpush.msra.mxu0 %v29
    %59 = vmatpush.msra.mxu0 %v28
    %60 = vmatpush.msra.mxu0 %v27
    %61 = vmatpush.msra.mxu0 %v26
    %62 = vmatmul.f32.gmra.mxu0 %v25
    %v63 = vpop.f32.mrf.mxu0
    %v64 = vadd.f32 %v44, %v63
    %65 = vdwg.mxu0
    %66 = vst [vmem:[#allocation4] sm:$0x3] %v64
    %v67 = vmax.f32 %v64, 0.0
    %v68 = vld [vmem:[%s3] sm:$0xff]
    %v69 = vld [vmem:[%s3 + $0x8] sm:$0xff]
    %v70 = vld [vmem:[%s3 + $0x10] sm:$0xff]
    %v71 = vld [vmem:[%s3 + $0x18] sm:$0xff]
    %v72 = vld [vmem:[%s3 + $0x20] sm:$0xff]
    %v73 = vld [vmem:[%s3 + $0x28] sm:$0xff]
    %v74 = vld [vmem:[%s3 + $0x30] sm:$0xff]
    %v75 = vld [vmem:[%s3 + $0x38] sm:$0xff]
    %v76 = vld [vmem:[%s3 + $0x40] sm:$0xff]
    %v77 = vld [vmem:[%s3 + $0x48] sm:$0xff]
    %v78 = vld [vmem:[%s3 + $0x50] sm:$0xff]
    %v79 = vld [vmem:[%s3 + $0x58] sm:$0xff]
    %v80 = vld [vmem:[%s3 + $0x60] sm:$0xff]
    %v81 = vld [vmem:[%s3 + $0x68] sm:$0xff]
    %v82 = vld [vmem:[%s3 + $0x70] sm:$0xff]
    %v83 = vld [vmem:[%s3 + $0x78] sm:$0xff]
    %v84 = vld [vmem:[%s4] sm:$0x1]
    %v86 = vperm.slane %v84, 0
    %88 = vmatpush.msra.mxu0 %v83
    %89 = vmatpush.msra.mxu0 %v82
    %90 = vmatpush.msra.mxu0 %v81
    %91 = vmatpush.msra.mxu0 %v80
    %92 = vmatpush.msra.mxu0 %v79
    %93 = vmatpush.msra.mxu0 %v78
    %94 = vmatpush.msra.mxu0 %v77
    %95 = vmatpush.msra.mxu0 %v76
    %96 = vmatpush.msra.mxu0 %v75
    %97 = vmatpush.msra.mxu0 %v74
    %98 = vmatpush.msra.mxu0 %v73
    %99 = vmatpush.msra.mxu0 %v72
    %100 = vmatpush.msra.mxu0 %v71
    %101 = vmatpush.msra.mxu0 %v70
    %102 = vmatpush.msra.mxu0 %v69
    %103 = vmatpush.msra.mxu0 %v68
    %104 = vmatmul.f32.gmra.mxu0 %v67
    %v105 = vpop.f32.mrf.mxu0
    %v106 = vadd.f32 %v86, %v105
    %107 = vdwg.mxu0
    %108 = vst [vmem:[#allocation2] sm:$0x3] %v106
    // Predicated region
    $region22: #{softmaxnet_forward.3} parent=1 // pred_check
      _
    $region23: #{softmaxnet_forward.3} parent=1 // pred_check_branch
      %110 = sbr.rel (0) target = $region25
    $region24: #{softmaxnet_forward.3} parent=1 // pred_region
      %112 = vsyncadd [#allocation3], 0
      %s114 = sshll.u32 [#allocation2], 4
      %s115 = int_to_ptr.vmem [resolvable:$true] %s114
      %s116 = sshll.u32 %s5, 4
      %s117 = int_to_ptr.hbm [resolvable:$true] %s116
      %119 = dma.vmem_to_hbm [thread:$0]  %s115, 32, %s117, [#allocation3]
    $region25: #{softmaxnet_forward.3} parent=1 // pred_fallthru
      _
    // Predicated region
    $region26: #{softmaxnet_forward.3} parent=1 // pred_check
      _
    $region27: #{softmaxnet_forward.3} parent=1 // pred_check_branch
      %121 = sbr.rel (0) target = $region29
    $region28: #{softmaxnet_forward.3} parent=1 // pred_region
      %123 = vsyncadd [#allocation5], 0
      %s125 = sshll.u32 [#allocation4], 4
      %s126 = int_to_ptr.vmem [resolvable:$true] %s125
      %s127 = sshll.u32 %s6, 4
      %s128 = int_to_ptr.hbm [resolvable:$true] %s127
      %130 = dma.vmem_to_hbm [thread:$0]  %s126, 32, %s128, [#allocation5]
    $region29: #{softmaxnet_forward.3} parent=1 // pred_fallthru
      _
    // Predicated region
    $region30: #{softmaxnet_forward.3} parent=1 // pred_check
      _
    $region31: #{softmaxnet_forward.3} parent=1 // pred_check_branch
      %132 = sbr.rel (0) target = $region33
    $region32: #{softmaxnet_forward.3} parent=1 // pred_region
      %134 = dma.done [#allocation3], 32
    $region33: #{softmaxnet_forward.3} parent=1 // pred_fallthru
      _
    // Predicated region
    $region34: #{softmaxnet_forward.3} parent=1 // pred_check
      _
    $region35: #{softmaxnet_forward.3} parent=1 // pred_check_branch
      %136 = sbr.rel (0) target = $region37
    $region36: #{softmaxnet_forward.3} parent=1 // pred_region
      %138 = dma.done [#allocation5], 32
    $region37: #{softmaxnet_forward.3} parent=1 // pred_fallthru
      _
    %139 = vsyncpa [#allocation3], 1
    %140 = vsyncpa [#allocation5], 1

// kernel: softmaxnet_forward.2
$region0: #{softmaxnet_forward.2}
  #allocation0 [shape = 'u32[]', space=smem, size = 0x4, offset = 0x4, fixed_abs, tag = 'smem constant byte address 0x4 - core index']
  #allocation1 [shape = 'u32[72,128]{1,0:T(1,128)}', space=vmem, size = 0x9000, scoped, tag = 'internal scratch']
  #allocation2 [shape = 'f32[1,128]{1,0:T(1,128)}', space=vmem, size = 0x200, scoped, tag = 'scratch operand']
  #allocation3 [shape = 'bf16[256,128]{1,0:T(8,128)(2,1)}', space=vmem, size = 0x10000, scoped, tag = 'scratch operand']
  %s0 = inlined_call_operand.vmem [shape: bf16[2,256,27], index: 0, kind: input, shape index: {}]
  %s1 = inlined_call_operand.vmem [shape: bf16[128,128], index: 1, kind: input, shape index: {}]
  %s2 = inlined_call_operand.vmem [shape: f32[2,1,128], index: 2, kind: output, shape index: {}]
  %s3 = sld [smem:[#allocation0]]
  $region49: #{softmaxnet_forward.2} parent=0
    _
  %s5 = ssub.s32 1, %s3
  %s6 = scalar_select 0, %s5, %s3
  loop: start=0, step=1, limit=4
  $region2: #{softmaxnet_forward.2} parent=0 // loop_pre_header
    _
  $region3: #{softmaxnet_forward.2} parent=0 // loop_header
    %s8 = sphi 0, %s12
    %p9 = scmp.ge.s32.totalorder %s8, 4
    %s15 = sphi 0, %s27
    %s16 = sphi 0, %s23
    %s17 = sphi 0, %s15
    %s18 = sphi 0, %s16
    %s19 = sphi 0, %s17
    %s20 = sphi 0, %s18
    %s32 = sphi 0, %s34
    %s35 = sphi 0, %s32
    %s36 = sphi 0, %s35
    %s52 = sphi 0, %s36
    %s56 = sphi 0, %s56
    %s58 = sphi 0, %s56
    %s59 = sphi 0, %s58
    %s73 = sphi 0, %s59
    %s79 = sphi 0, %s81
    %s82 = sphi 0, %s79
    %s83 = sphi 0, %s82
    %s99 = sphi 0, %s83
  $region4: #{softmaxnet_forward.2} parent=0 // loop_header_branch
    %11 = sbr.rel (%p9) target = $region8
  $region5: #{softmaxnet_forward.2} parent=0 // loop_body
    %s13 = ssub.s32 %s8, 1
    %s14 = ssub.s32 %s8, 2
    %s21 = sadd.s32 1, %s16
    %p22 = scmp.ge.s32.totalorder %s21, 1
    %s23 = scalar_select %p22, 0, %s21
    %s24 = sadd.s32 1, %s15
    %s25 = scalar_select %p22, %s24, %s15
    %p26 = scmp.ge.s32.totalorder %s25, 2
    %s27 = scalar_select %p26, 0, %s25
    %s28 = ssub.s32 %s15, %s27
    %s29 = ssub.s32 %s16, %s23
    %s30 = sor.u32 %s28, %s29
    %p31 = scmp.eq.s32.totalorder %s30, 0
    %s33 = sadd.s32 %s32, 1
    %s34 = scalar_select %p31, %s32, %s33
    %p37 = pneg %p31
    %p38 = scmp.eq.s32.totalorder %s8, 1
    %p39 = por %p37, %p38
    %p40 = scmp.ne.s32.totalorder %s32, %s35
    %p41 = scmp.eq.s32.totalorder %s8, 0
    %p42 = por %p40, %p41
    %p43 = scmp.ne.s32.totalorder %s32, %s35
    %p44 = scmp.eq.s32.totalorder %s13, 1
    %p45 = por %p43, %p44
    %p46 = scmp.ne.s32.totalorder %s35, %s36
    %p47 = scmp.eq.s32.totalorder %s13, 0
    %p48 = por %p46, %p47
    %p49 = scmp.ne.s32.totalorder %s35, %s36
    %p50 = scmp.eq.s32.totalorder %s14, 1
    %p51 = por %p49, %p50
    %p53 = scmp.ne.s32.totalorder %s36, %s52
    %p54 = scmp.eq.s32.totalorder %s14, 0
    %p55 = por %p53, %p54
    %s57 = sadd.s32 %s56, 1
    %p60 = scmp.eq.s32.totalorder %s8, 1
    %p61 = scmp.ne.s32.totalorder %s56, %s58
    %p62 = scmp.eq.s32.totalorder %s8, 0
    %p63 = por %p61, %p62
    %p64 = scmp.ne.s32.totalorder %s56, %s58
    %p65 = scmp.eq.s32.totalorder %s13, 1
    %p66 = por %p64, %p65
    %p67 = scmp.ne.s32.totalorder %s58, %s59
    %p68 = scmp.eq.s32.totalorder %s13, 0
    %p69 = por %p67, %p68
    %p70 = scmp.ne.s32.totalorder %s58, %s59
    %p71 = scmp.eq.s32.totalorder %s14, 1
    %p72 = por %p70, %p71
    %p74 = scmp.ne.s32.totalorder %s59, %s73
    %p75 = scmp.eq.s32.totalorder %s14, 0
    %p76 = por %p74, %p75
    %s77 = ssub.s32 %s15, %s27
    %p78 = scmp.eq.s32.totalorder %s77, 0
    %s80 = sadd.s32 %s79, 1
    %s81 = scalar_select %p78, %s79, %s80
    %p84 = pneg %p78
    %p85 = scmp.eq.s32.totalorder %s8, 1
    %p86 = por %p84, %p85
    %p87 = scmp.ne.s32.totalorder %s79, %s82
    %p88 = scmp.eq.s32.totalorder %s8, 0
    %p89 = por %p87, %p88
    %p90 = scmp.ne.s32.totalorder %s79, %s82
    %p91 = scmp.eq.s32.totalorder %s13, 1
    %p92 = por %p90, %p91
    %p93 = scmp.ne.s32.totalorder %s82, %s83
    %p94 = scmp.eq.s32.totalorder %s13, 0
    %p95 = por %p93, %p94
    %p96 = scmp.ne.s32.totalorder %s82, %s83
    %p97 = scmp.eq.s32.totalorder %s14, 1
    %p98 = por %p96, %p97
    %p100 = scmp.ne.s32.totalorder %s83, %s99
    %p101 = scmp.eq.s32.totalorder %s14, 0
    %p102 = por %p100, %p101
    %p103 = scmp.le.s32.totalorder 1, %s8
    %p104 = scmp.lt.s32.totalorder %s8, 3
    %p105 = pnand %p103, %p104
    %p106 = pneg %p105
    // Predicated region
    $region9: #{softmaxnet_forward.2} parent=5 // pred_check
      _
    $region10: #{softmaxnet_forward.2} parent=5 // pred_check_branch
      %108 = sbr.rel (%p105) target = $region12
    $region11: #{softmaxnet_forward.2} parent=5 // pred_region
      %s109 = ssub.s32 %s8, 1
      // Predicated region
      $region13: #{softmaxnet_forward.2} parent=11 // pred_check
        %p110 = pneg %p69
      $region14: #{softmaxnet_forward.2} parent=11 // pred_check_branch
        %112 = sbr.rel (%p110) target = $region16
      $region15: #{softmaxnet_forward.2} parent=11 // pred_region
        _
      $region16: #{softmaxnet_forward.2} parent=11 // pred_fallthru
        _
    $region12: #{softmaxnet_forward.2} parent=5 // pred_fallthru
      _
    %p113 = scmp.lt.s32.totalorder %s8, 2
    // Predicated region
    $region17: #{softmaxnet_forward.2} parent=5 // pred_check
      %p114 = pneg %p113
    $region18: #{softmaxnet_forward.2} parent=5 // pred_check_branch
      %116 = sbr.rel (%p114) target = $region20
    $region19: #{softmaxnet_forward.2} parent=5 // pred_region
      // Predicated region
      $region21: #{softmaxnet_forward.2} parent=19 // pred_check
        %p117 = pneg %p42
      $region22: #{softmaxnet_forward.2} parent=19 // pred_check_branch
        %119 = sbr.rel (%p117) target = $region24
      $region23: #{softmaxnet_forward.2} parent=19 // pred_region
        %s120 = smul.u32 32, %s16
        %p121 = scmp.lt.s32.totalorder %s15, 1
        %s122 = scalar_select %p121, %s15, 1
        %p123 = scmp.lt.s32.totalorder %s120, 31
        %s124 = scalar_select %p123, %s120, 31
        %s125 = smul.addr %s122, 32
        %s126 = sadd.s32 %s124, %s125
        %s127 = smul.addr %s126, 4
        %s128 = scalar_lea.vmem %s0, %s127
        %s129 = smul.u32 32, %s16
      $region24: #{softmaxnet_forward.2} parent=19 // pred_fallthru
        _
    $region20: #{softmaxnet_forward.2} parent=5 // pred_fallthru
      _
    %p130 = scmp.le.s32.totalorder 1, %s8
    %p131 = scmp.lt.s32.totalorder %s8, 3
    %p132 = pnand %p130, %p131
    %p133 = pneg %p132
    // Predicated region
    $region25: #{softmaxnet_forward.2} parent=5 // pred_check
      _
    $region26: #{softmaxnet_forward.2} parent=5 // pred_check_branch
      %135 = sbr.rel (%p132) target = $region28
    $region27: #{softmaxnet_forward.2} parent=5 // pred_region
      %s136 = ssub.s32 %s8, 1
      %s137 = smul.u32 32, %s18
      %p138 = scmp.lt.s32.totalorder %s17, 1
      %s139 = scalar_select %p138, %s17, 1
      %p140 = scmp.lt.s32.totalorder %s137, 31
      %s141 = scalar_select %p140, %s137, 31
      %s142 = smul.addr %s139, 32
      %s143 = sadd.s32 %s141, %s142
      %s144 = smul.addr %s143, 4
      %s145 = scalar_lea.vmem %s0, %s144
      %p146 = pneg %p48
      %p147 = pneg %p45
      %p148 = pneg %p69
      %p149 = pneg %p66
      %p150 = pneg %p95
      %p151 = pneg %p92
      %p152 = scmp.lt.s32.totalorder %s17, 1
      %s153 = scalar_select %p152, %s17, 1
      %s154 = scalar_lea.vmem %s2, %s153
      %s155 = smul.u32 32, %s18
      %p156 = scmp.lt.s32.totalorder %s17, 1
      %s157 = scalar_select %p156, %s17, 1
      %p158 = scmp.lt.s32.totalorder %s155, 31
      %s159 = scalar_select %p158, %s155, 31
      %s160 = smul.addr %s157, 32
      %s161 = sadd.s32 %s159, %s160
      %s162 = smul.addr %s161, 4
      %s163 = scalar_lea.vmem %s0, %s162
      %s164 = smul.u32 32, %s18
      %p165 = scmp.lt.s32.totalorder %s17, 1
      %s166 = scalar_select %p165, %s17, 1
      %s167 = scalar_lea.vmem %s2, %s166
      %p168 = scmp.eq.s32.totalorder %s18, 0
      // Predicated region
      $region29: #{softmaxnet_forward.2} parent=27 // pred_check
        %p169 = pneg %p168
      $region30: #{softmaxnet_forward.2} parent=27 // pred_check_branch
        %171 = sbr.rel (%p169) target = $region32
      $region31: #{softmaxnet_forward.2} parent=27 // pred_region
        %172 = vst [vmem:[#allocation2] sm:$0x1] 0.0
        %v173 = vlaneseq
        %v174 = vand.u32 %v173, 127
        %vm175 = vcmp.eq.s32.totalorder %v174, 27
        %v176 = vsel %vm175, 1.0, 0.0
        %v177 = vpack.c.bf16 %v176, %v176
        %178 = vst [vmem:[#allocation3] sm:$0xf] %v177
        %179 = vst [vmem:[#allocation3 + $0x4] sm:$0xf] %v177
        %180 = vst [vmem:[#allocation3 + $0x8] sm:$0xf] %v177
        %181 = vst [vmem:[#allocation3 + $0xc] sm:$0xf] %v177
        %182 = vst [vmem:[#allocation3 + $0x10] sm:$0xf] %v177
        %183 = vst [vmem:[#allocation3 + $0x14] sm:$0xf] %v177
        %184 = vst [vmem:[#allocation3 + $0x18] sm:$0xf] %v177
        %185 = vst [vmem:[#allocation3 + $0x1c] sm:$0xf] %v177
        %186 = vst [vmem:[#allocation3 + $0x20] sm:$0xf] %v177
        %187 = vst [vmem:[#allocation3 + $0x24] sm:$0xf] %v177
        %188 = vst [vmem:[#allocation3 + $0x28] sm:$0xf] %v177
        %189 = vst [vmem:[#allocation3 + $0x2c] sm:$0xf] %v177
        %190 = vst [vmem:[#allocation3 + $0x30] sm:$0xf] %v177
        %191 = vst [vmem:[#allocation3 + $0x34] sm:$0xf] %v177
        %192 = vst [vmem:[#allocation3 + $0x38] sm:$0xf] %v177
        %193 = vst [vmem:[#allocation3 + $0x3c] sm:$0xf] %v177
        %194 = vst [vmem:[#allocation3 + $0x40] sm:$0xf] %v177
        %195 = vst [vmem:[#allocation3 + $0x44] sm:$0xf] %v177
        %196 = vst [vmem:[#allocation3 + $0x48] sm:$0xf] %v177
        %197 = vst [vmem:[#allocation3 + $0x4c] sm:$0xf] %v177
        %198 = vst [vmem:[#allocation3 + $0x50] sm:$0xf] %v177
        %199 = vst [vmem:[#allocation3 + $0x54] sm:$0xf] %v177
        %200 = vst [vmem:[#allocation3 + $0x58] sm:$0xf] %v177
        %201 = vst [vmem:[#allocation3 + $0x5c] sm:$0xf] %v177
        %202 = vst [vmem:[#allocation3 + $0x60] sm:$0xf] %v177
        %203 = vst [vmem:[#allocation3 + $0x64] sm:$0xf] %v177
        %204 = vst [vmem:[#allocation3 + $0x68] sm:$0xf] %v177
        %205 = vst [vmem:[#allocation3 + $0x6c] sm:$0xf] %v177
        %206 = vst [vmem:[#allocation3 + $0x70] sm:$0xf] %v177
        %207 = vst [vmem:[#allocation3 + $0x74] sm:$0xf] %v177
        %208 = vst [vmem:[#allocation3 + $0x78] sm:$0xf] %v177
        %209 = vst [vmem:[#allocation3 + $0x7c] sm:$0xf] %v177
      $region32: #{softmaxnet_forward.2} parent=27 // pred_fallthru
        _
      %v210 = vld [vmem:[%s163] sm:$0xf]
      %v211 = vld [vmem:[%s163 + $0x4] sm:$0xf]
      %v212 = vld [vmem:[%s163 + $0x8] sm:$0xf]
      %v213 = vld [vmem:[%s163 + $0xc] sm:$0xf]
      %v214 = vld [vmem:[%s163 + $0x10] sm:$0xf]
      %v215 = vld [vmem:[%s163 + $0x14] sm:$0xf]
      %v216 = vld [vmem:[%s163 + $0x18] sm:$0xf]
      %v217 = vld [vmem:[%s163 + $0x1c] sm:$0xf]
      %v218 = vld [vmem:[%s163 + $0x20] sm:$0xf]
      %v219 = vld [vmem:[%s163 + $0x24] sm:$0xf]
      %v220 = vld [vmem:[%s163 + $0x28] sm:$0xf]
      %v221 = vld [vmem:[%s163 + $0x2c] sm:$0xf]
      %v222 = vld [vmem:[%s163 + $0x30] sm:$0xf]
      %v223 = vld [vmem:[%s163 + $0x34] sm:$0xf]
      %v224 = vld [vmem:[%s163 + $0x38] sm:$0xf]
      %v225 = vld [vmem:[%s163 + $0x3c] sm:$0xf]
      %v226 = vld [vmem:[%s163 + $0x40] sm:$0xf]
      %v227 = vld [vmem:[%s163 + $0x44] sm:$0xf]
      %v228 = vld [vmem:[%s163 + $0x48] sm:$0xf]
      %v229 = vld [vmem:[%s163 + $0x4c] sm:$0xf]
      %v230 = vld [vmem:[%s163 + $0x50] sm:$0xf]
      %v231 = vld [vmem:[%s163 + $0x54] sm:$0xf]
      %v232 = vld [vmem:[%s163 + $0x58] sm:$0xf]
      %v233 = vld [vmem:[%s163 + $0x5c] sm:$0xf]
      %v234 = vld [vmem:[%s163 + $0x60] sm:$0xf]
      %v235 = vld [vmem:[%s163 + $0x64] sm:$0xf]
      %v236 = vld [vmem:[%s163 + $0x68] sm:$0xf]
      %v237 = vld [vmem:[%s163 + $0x6c] sm:$0xf]
      %v238 = vld [vmem:[%s163 + $0x70] sm:$0xf]
      %v239 = vld [vmem:[%s163 + $0x74] sm:$0xf]
      %v240 = vld [vmem:[%s163 + $0x78] sm:$0xf]
      %v241 = vld [vmem:[%s163 + $0x7c] sm:$0xf]
      %vm242 = vcmask 216064
      %243 = vst.msk [vmem:[#allocation3] sm:$0xf] %vm242, %v210
      %244 = vst.msk [vmem:[#allocation3 + $0x4] sm:$0xf] %vm242, %v211
      %245 = vst.msk [vmem:[#allocation3 + $0x8] sm:$0xf] %vm242, %v212
      %246 = vst.msk [vmem:[#allocation3 + $0xc] sm:$0xf] %vm242, %v213
      %247 = vst.msk [vmem:[#allocation3 + $0x10] sm:$0xf] %vm242, %v214
      %248 = vst.msk [vmem:[#allocation3 + $0x14] sm:$0xf] %vm242, %v215
      %249 = vst.msk [vmem:[#allocation3 + $0x18] sm:$0xf] %vm242, %v216
      %250 = vst.msk [vmem:[#allocation3 + $0x1c] sm:$0xf] %vm242, %v217
      %251 = vst.msk [vmem:[#allocation3 + $0x20] sm:$0xf] %vm242, %v218
      %252 = vst.msk [vmem:[#allocation3 + $0x24] sm:$0xf] %vm242, %v219
      %253 = vst.msk [vmem:[#allocation3 + $0x28] sm:$0xf] %vm242, %v220
      %254 = vst.msk [vmem:[#allocation3 + $0x2c] sm:$0xf] %vm242, %v221
      %255 = vst.msk [vmem:[#allocation3 + $0x30] sm:$0xf] %vm242, %v222
      %256 = vst.msk [vmem:[#allocation3 + $0x34] sm:$0xf] %vm242, %v223
      %257 = vst.msk [vmem:[#allocation3 + $0x38] sm:$0xf] %vm242, %v224
      %258 = vst.msk [vmem:[#allocation3 + $0x3c] sm:$0xf] %vm242, %v225
      %259 = vst.msk [vmem:[#allocation3 + $0x40] sm:$0xf] %vm242, %v226
      %260 = vst.msk [vmem:[#allocation3 + $0x44] sm:$0xf] %vm242, %v227
      %261 = vst.msk [vmem:[#allocation3 + $0x48] sm:$0xf] %vm242, %v228
      %262 = vst.msk [vmem:[#allocation3 + $0x4c] sm:$0xf] %vm242, %v229
      %263 = vst.msk [vmem:[#allocation3 + $0x50] sm:$0xf] %vm242, %v230
      %264 = vst.msk [vmem:[#allocation3 + $0x54] sm:$0xf] %vm242, %v231
      %265 = vst.msk [vmem:[#allocation3 + $0x58] sm:$0xf] %vm242, %v232
      %266 = vst.msk [vmem:[#allocation3 + $0x5c] sm:$0xf] %vm242, %v233
      %267 = vst.msk [vmem:[#allocation3 + $0x60] sm:$0xf] %vm242, %v234
      %268 = vst.msk [vmem:[#allocation3 + $0x64] sm:$0xf] %vm242, %v235
      %269 = vst.msk [vmem:[#allocation3 + $0x68] sm:$0xf] %vm242, %v236
      %270 = vst.msk [vmem:[#allocation3 + $0x6c] sm:$0xf] %vm242, %v237
      %271 = vst.msk [vmem:[#allocation3 + $0x70] sm:$0xf] %vm242, %v238
      %272 = vst.msk [vmem:[#allocation3 + $0x74] sm:$0xf] %vm242, %v239
      %273 = vst.msk [vmem:[#allocation3 + $0x78] sm:$0xf] %vm242, %v240
      %274 = vst.msk [vmem:[#allocation3 + $0x7c] sm:$0xf] %vm242, %v241
      %v275 = vld [vmem:[#allocation3] sm:$0xf]
      %v276 = vld [vmem:[#allocation3 + $0x4] sm:$0xf]
      %v277 = vld [vmem:[#allocation3 + $0x8] sm:$0xf]
      %v278 = vld [vmem:[#allocation3 + $0xc] sm:$0xf]
      %v279 = vld [vmem:[#allocation3 + $0x10] sm:$0xf]
      %v280 = vld [vmem:[#allocation3 + $0x14] sm:$0xf]
      %v281 = vld [vmem:[#allocation3 + $0x18] sm:$0xf]
      %v282 = vld [vmem:[#allocation3 + $0x1c] sm:$0xf]
      %v283 = vld [vmem:[#allocation3 + $0x20] sm:$0xf]
      %v284 = vld [vmem:[#allocation3 + $0x24] sm:$0xf]
      %v285 = vld [vmem:[#allocation3 + $0x28] sm:$0xf]
      %v286 = vld [vmem:[#allocation3 + $0x2c] sm:$0xf]
      %v287 = vld [vmem:[#allocation3 + $0x30] sm:$0xf]
      %v288 = vld [vmem:[#allocation3 + $0x34] sm:$0xf]
      %v289 = vld [vmem:[#allocation3 + $0x38] sm:$0xf]
      %v290 = vld [vmem:[#allocation3 + $0x3c] sm:$0xf]
      %v291 = vld [vmem:[#allocation3 + $0x40] sm:$0xf]
      %v292 = vld [vmem:[#allocation3 + $0x44] sm:$0xf]
      %v293 = vld [vmem:[#allocation3 + $0x48] sm:$0xf]
      %v294 = vld [vmem:[#allocation3 + $0x4c] sm:$0xf]
      %v295 = vld [vmem:[#allocation3 + $0x50] sm:$0xf]
      %v296 = vld [vmem:[#allocation3 + $0x54] sm:$0xf]
      %v297 = vld [vmem:[#allocation3 + $0x58] sm:$0xf]
      %v298 = vld [vmem:[#allocation3 + $0x5c] sm:$0xf]
      %v299 = vld [vmem:[#allocation3 + $0x60] sm:$0xf]
      %v300 = vld [vmem:[#allocation3 + $0x64] sm:$0xf]
      %v301 = vld [vmem:[#allocation3 + $0x68] sm:$0xf]
      %v302 = vld [vmem:[#allocation3 + $0x6c] sm:$0xf]
      %v303 = vld [vmem:[#allocation3 + $0x70] sm:$0xf]
      %v304 = vld [vmem:[#allocation3 + $0x74] sm:$0xf]
      %v305 = vld [vmem:[#allocation3 + $0x78] sm:$0xf]
      %v306 = vld [vmem:[#allocation3 + $0x7c] sm:$0xf]
      %v307 = vld [vmem:[%s1] sm:$0xf]
      %v308 = vld [vmem:[%s1 + $0x4] sm:$0xf]
      %v309 = vld [vmem:[%s1 + $0x8] sm:$0xf]
      %v310 = vld [vmem:[%s1 + $0xc] sm:$0xf]
      %v311 = vld [vmem:[%s1 + $0x10] sm:$0xf]
      %v312 = vld [vmem:[%s1 + $0x14] sm:$0xf]
      %v313 = vld [vmem:[%s1 + $0x18] sm:$0xf]
      %v314 = vld [vmem:[%s1 + $0x1c] sm:$0xf]
      %v315 = vld [vmem:[%s1 + $0x20] sm:$0xf]
      %v316 = vld [vmem:[%s1 + $0x24] sm:$0xf]
      %v317 = vld [vmem:[%s1 + $0x28] sm:$0xf]
      %v318 = vld [vmem:[%s1 + $0x2c] sm:$0xf]
      %v319 = vld [vmem:[%s1 + $0x30] sm:$0xf]
      %v320 = vld [vmem:[%s1 + $0x34] sm:$0xf]
      %v321 = vld [vmem:[%s1 + $0x38] sm:$0xf]
      %v322 = vld [vmem:[%s1 + $0x3c] sm:$0xf]
      %v355 = vunpack.c.l.b16 %v275
      %v356 = vunpack.c.l.b16 %v276
      %v357 = vunpack.c.l.b16 %v277
      %v358 = vunpack.c.l.b16 %v278
      %v359 = vunpack.c.l.b16 %v279
      %v360 = vunpack.c.l.b16 %v280
      %v361 = vunpack.c.l.b16 %v281
      %v362 = vunpack.c.l.b16 %v282
      %v363 = vunpack.c.l.b16 %v283
      %v364 = vunpack.c.l.b16 %v284
      %v365 = vunpack.c.l.b16 %v285
      %v366 = vunpack.c.l.b16 %v286
      %v367 = vunpack.c.l.b16 %v287
      %v368 = vunpack.c.l.b16 %v288
      %v369 = vunpack.c.l.b16 %v289
      %v370 = vunpack.c.l.b16 %v290
      %v371 = vunpack.c.l.b16 %v291
      %v372 = vunpack.c.l.b16 %v292
      %v373 = vunpack.c.l.b16 %v293
      %v374 = vunpack.c.l.b16 %v294
      %v375 = vunpack.c.l.b16 %v295
      %v376 = vunpack.c.l.b16 %v296
      %v377 = vunpack.c.l.b16 %v297
      %v378 = vunpack.c.l.b16 %v298
      %v379 = vunpack.c.l.b16 %v299
      %v380 = vunpack.c.l.b16 %v300
      %v381 = vunpack.c.l.b16 %v301
      %v382 = vunpack.c.l.b16 %v302
      %v383 = vunpack.c.l.b16 %v303
      %v384 = vunpack.c.l.b16 %v304
      %v385 = vunpack.c.l.b16 %v305
      %v386 = vunpack.c.l.b16 %v306
      %v387 = vpack.c.b16 %v356, %v355
      %v388 = vpack.c.b16 %v358, %v357
      %v389 = vpack.c.b16 %v360, %v359
      %v390 = vpack.c.b16 %v362, %v361
      %v391 = vpack.c.b16 %v364, %v363
      %v392 = vpack.c.b16 %v366, %v365
      %v393 = vpack.c.b16 %v368, %v367
      %v394 = vpack.c.b16 %v370, %v369
      %v395 = vpack.c.b16 %v372, %v371
      %v396 = vpack.c.b16 %v374, %v373
      %v397 = vpack.c.b16 %v376, %v375
      %v398 = vpack.c.b16 %v378, %v377
      %v399 = vpack.c.b16 %v380, %v379
      %v400 = vpack.c.b16 %v382, %v381
      %v401 = vpack.c.b16 %v384, %v383
      %v402 = vpack.c.b16 %v386, %v385
      %v435 = vunpack.c.l.b16 %v307
      %v436 = vunpack.c.l.b16 %v308
      %v437 = vunpack.c.l.b16 %v309
      %v438 = vunpack.c.l.b16 %v310
      %v439 = vunpack.c.l.b16 %v311
      %v440 = vunpack.c.l.b16 %v312
      %v441 = vunpack.c.l.b16 %v313
      %v442 = vunpack.c.l.b16 %v314
      %v443 = vunpack.c.l.b16 %v315
      %v444 = vunpack.c.l.b16 %v316
      %v445 = vunpack.c.l.b16 %v317
      %v446 = vunpack.c.l.b16 %v318
      %v447 = vunpack.c.l.b16 %v319
      %v448 = vunpack.c.l.b16 %v320
      %v449 = vunpack.c.l.b16 %v321
      %v450 = vunpack.c.l.b16 %v322
      %v451 = vpack.c.b16 %v436, %v435
      %v452 = vpack.c.b16 %v438, %v437
      %v453 = vpack.c.b16 %v440, %v439
      %v454 = vpack.c.b16 %v442, %v441
      %v455 = vpack.c.b16 %v444, %v443
      %v456 = vpack.c.b16 %v446, %v445
      %v457 = vpack.c.b16 %v448, %v447
      %v458 = vpack.c.b16 %v450, %v449
      %467 = vmatpush.bf16.msra.mxu0 %v458
      %468 = vmatpush.bf16.msra.mxu0 %v457
      %469 = vmatpush.bf16.msra.mxu0 %v456
      %470 = vmatpush.bf16.msra.mxu0 %v455
      %471 = vmatpush.bf16.msra.mxu0 %v454
      %472 = vmatpush.bf16.msra.mxu0 %v453
      %473 = vmatpush.bf16.msra.mxu0 %v452
      %474 = vmatpush.bf16.msra.mxu0 %v451
      %475 = vmatmul.bf16.gmra.mxu0 %v387
      %v476 = vpop.f32.mrf.mxu0
      %v477 = vadd.f32 0.0, %v476
      %v478 = vpop.f32.mrf.mxu0
      %v479 = vadd.f32 0.0, %v478
      %480 = vmatmul.bf16.gmra.mxu0 %v388
      %v481 = vpop.f32.mrf.mxu0
      %v482 = vadd.f32 0.0, %v481
      %v483 = vpop.f32.mrf.mxu0
      %v484 = vadd.f32 0.0, %v483
      %485 = vmatmul.bf16.gmra.mxu0 %v389
      %v486 = vpop.f32.mrf.mxu0
      %v487 = vadd.f32 0.0, %v486
      %v488 = vpop.f32.mrf.mxu0
      %v489 = vadd.f32 0.0, %v488
      %490 = vmatmul.bf16.gmra.mxu0 %v390
      %v491 = vpop.f32.mrf.mxu0
      %v492 = vadd.f32 0.0, %v491
      %v493 = vpop.f32.mrf.mxu0
      %v494 = vadd.f32 0.0, %v493
      %495 = vmatmul.bf16.gmra.mxu0 %v391
      %v496 = vpop.f32.mrf.mxu0
      %v497 = vadd.f32 0.0, %v496
      %v498 = vpop.f32.mrf.mxu0
      %v499 = vadd.f32 0.0, %v498
      %500 = vmatmul.bf16.gmra.mxu0 %v392
      %v501 = vpop.f32.mrf.mxu0
      %v502 = vadd.f32 0.0, %v501
      %v503 = vpop.f32.mrf.mxu0
      %v504 = vadd.f32 0.0, %v503
      %505 = vmatmul.bf16.gmra.mxu0 %v393
      %v506 = vpop.f32.mrf.mxu0
      %v507 = vadd.f32 0.0, %v506
      %v508 = vpop.f32.mrf.mxu0
      %v509 = vadd.f32 0.0, %v508
      %510 = vmatmul.bf16.gmra.mxu0 %v394
      %v511 = vpop.f32.mrf.mxu0
      %v512 = vadd.f32 0.0, %v511
      %v513 = vpop.f32.mrf.mxu0
      %v514 = vadd.f32 0.0, %v513
      %515 = vmatmul.bf16.gmra.mxu0 %v395
      %v516 = vpop.f32.mrf.mxu0
      %v517 = vadd.f32 0.0, %v516
      %v518 = vpop.f32.mrf.mxu0
      %v519 = vadd.f32 0.0, %v518
      %520 = vmatmul.bf16.gmra.mxu0 %v396
      %v521 = vpop.f32.mrf.mxu0
      %v522 = vadd.f32 0.0, %v521
      %v523 = vpop.f32.mrf.mxu0
      %v524 = vadd.f32 0.0, %v523
      %525 = vmatmul.bf16.gmra.mxu0 %v397
      %v526 = vpop.f32.mrf.mxu0
      %v527 = vadd.f32 0.0, %v526
      %v528 = vpop.f32.mrf.mxu0
      %v529 = vadd.f32 0.0, %v528
      %530 = vmatmul.bf16.gmra.mxu0 %v398
      %v531 = vpop.f32.mrf.mxu0
      %v532 = vadd.f32 0.0, %v531
      %v533 = vpop.f32.mrf.mxu0
      %v534 = vadd.f32 0.0, %v533
      %535 = vmatmul.bf16.gmra.mxu0 %v399
      %v536 = vpop.f32.mrf.mxu0
      %v537 = vadd.f32 0.0, %v536
      %v538 = vpop.f32.mrf.mxu0
      %v539 = vadd.f32 0.0, %v538
      %540 = vmatmul.bf16.gmra.mxu0 %v400
      %v541 = vpop.f32.mrf.mxu0
      %v542 = vadd.f32 0.0, %v541
      %v543 = vpop.f32.mrf.mxu0
      %v544 = vadd.f32 0.0, %v543
      %545 = vmatmul.bf16.gmra.mxu0 %v401
      %v546 = vpop.f32.mrf.mxu0
      %v547 = vadd.f32 0.0, %v546
      %v548 = vpop.f32.mrf.mxu0
      %v549 = vadd.f32 0.0, %v548
      %550 = vmatmul.bf16.gmra.mxu0 %v402
      %v551 = vpop.f32.mrf.mxu0
      %v552 = vadd.f32 0.0, %v551
      %v553 = vpop.f32.mrf.mxu0
      %v554 = vadd.f32 0.0, %v553
      %555 = vdwg.mxu0
      %v556 = vmax.f32 %v477, 0.0
      %v557 = vmax.f32 %v479, 0.0
      %v558 = vmax.f32 %v482, 0.0
      %v559 = vmax.f32 %v484, 0.0
      %v560 = vmax.f32 %v487, 0.0
      %v561 = vmax.f32 %v489, 0.0
      %v562 = vmax.f32 %v492, 0.0
      %v563 = vmax.f32 %v494, 0.0
      %v564 = vmax.f32 %v497, 0.0
      %v565 = vmax.f32 %v499, 0.0
      %v566 = vmax.f32 %v502, 0.0
      %v567 = vmax.f32 %v504, 0.0
      %v568 = vmax.f32 %v507, 0.0
      %v569 = vmax.f32 %v509, 0.0
      %v570 = vmax.f32 %v512, 0.0
      %v571 = vmax.f32 %v514, 0.0
      %v572 = vmax.f32 %v517, 0.0
      %v573 = vmax.f32 %v519, 0.0
      %v574 = vmax.f32 %v522, 0.0
      %v575 = vmax.f32 %v524, 0.0
      %v576 = vmax.f32 %v527, 0.0
      %v577 = vmax.f32 %v529, 0.0
      %v578 = vmax.f32 %v532, 0.0
      %v579 = vmax.f32 %v534, 0.0
      %v580 = vmax.f32 %v537, 0.0
      %v581 = vmax.f32 %v539, 0.0
      %v582 = vmax.f32 %v542, 0.0
      %v583 = vmax.f32 %v544, 0.0
      %v584 = vmax.f32 %v547, 0.0
      %v585 = vmax.f32 %v549, 0.0
      %v586 = vmax.f32 %v552, 0.0
      %v587 = vmax.f32 %v554, 0.0
      %v588 = vld [vmem:[#allocation2] sm:$0x1]
      %v589 = vadd.f32 %v556, %v557
      %v590 = vadd.f32 %v589, %v558
      %v591 = vadd.f32 %v590, %v559
      %v592 = vadd.f32 %v591, %v560
      %v593 = vadd.f32 %v592, %v561
      %v594 = vadd.f32 %v593, %v562
      %v595 = vadd.f32 %v594, %v563
      %v596 = vadd.f32 %v595, %v564
      %v597 = vadd.f32 %v596, %v565
      %v598 = vadd.f32 %v597, %v566
      %v599 = vadd.f32 %v598, %v567
      %v600 = vadd.f32 %v599, %v568
      %v601 = vadd.f32 %v600, %v569
      %v602 = vadd.f32 %v601, %v570
      %v603 = vadd.f32 %v602, %v571
      %v604 = vadd.f32 %v603, %v572
      %v605 = vadd.f32 %v604, %v573
      %v606 = vadd.f32 %v605, %v574
      %v607 = vadd.f32 %v606, %v575
      %v608 = vadd.f32 %v607, %v576
      %v609 = vadd.f32 %v608, %v577
      %v610 = vadd.f32 %v609, %v578
      %v611 = vadd.f32 %v610, %v579
      %v612 = vadd.f32 %v611, %v580
      %v613 = vadd.f32 %v612, %v581
      %v614 = vadd.f32 %v613, %v582
      %v615 = vadd.f32 %v614, %v583
      %v616 = vadd.f32 %v615, %v584
      %v617 = vadd.f32 %v616, %v585
      %v618 = vadd.f32 %v617, %v586
      %v619 = vadd.f32 %v618, %v587
      %v620 = vrot.slane %v619, 4
      %v621 = vadd.f32 %v619, %v620
      %v622 = vrot.slane %v621, 2
      %v623 = vadd.f32 %v621, %v622
      %v624 = vrot.slane %v623, 1
      %v625 = vadd.f32 %v623, %v624
      %v626 = vadd.f32 %v588, %v625
      %627 = vst [vmem:[#allocation2] sm:$0x1] %v626
      // Predicated region
      $region33: #{softmaxnet_forward.2} parent=27 // pred_check
        %p628 = pneg %p168
      $region34: #{softmaxnet_forward.2} parent=27 // pred_check_branch
        %630 = sbr.rel (%p628) target = $region36
      $region35: #{softmaxnet_forward.2} parent=27 // pred_region
        %v631 = vld [vmem:[#allocation2] sm:$0x1]
        %632 = vst [vmem:[%s167] sm:$0x1] %v631
      $region36: #{softmaxnet_forward.2} parent=27 // pred_fallthru
        _
      %p633 = scmp.lt.s32.totalorder %s17, 1
      %s634 = scalar_select %p633, %s17, 1
      %s635 = scalar_lea.vmem %s2, %s634
      // Predicated region
      $region37: #{softmaxnet_forward.2} parent=27 // pred_check
        %p636 = pneg %p92
      $region38: #{softmaxnet_forward.2} parent=27 // pred_check_branch
        %638 = sbr.rel (%p636) target = $region40
      $region39: #{softmaxnet_forward.2} parent=27 // pred_region
        _
      $region40: #{softmaxnet_forward.2} parent=27 // pred_fallthru
        _
    $region28: #{softmaxnet_forward.2} parent=5 // pred_fallthru
      _
    %p639 = scmp.le.s32.totalorder 2, %s8
    // Predicated region
    $region41: #{softmaxnet_forward.2} parent=5 // pred_check
      %p640 = pneg %p639
    $region42: #{softmaxnet_forward.2} parent=5 // pred_check_branch
      %642 = sbr.rel (%p640) target = $region44
    $region43: #{softmaxnet_forward.2} parent=5 // pred_region
      %s643 = ssub.s32 %s8, 2
      // Predicated region
      $region45: #{softmaxnet_forward.2} parent=43 // pred_check
        %p644 = pneg %p98
      $region46: #{softmaxnet_forward.2} parent=43 // pred_check_branch
        %646 = sbr.rel (%p644) target = $region48
      $region47: #{softmaxnet_forward.2} parent=43 // pred_region
        %p647 = scmp.lt.s32.totalorder %s19, 1
        %s648 = scalar_select %p647, %s19, 1
        %s649 = scalar_lea.vmem %s2, %s648
      $region48: #{softmaxnet_forward.2} parent=43 // pred_fallthru
        _
    $region44: #{softmaxnet_forward.2} parent=5 // pred_fallthru
      _
  $region6: #{softmaxnet_forward.2} parent=0 // loop_footer
    %s12 = sadd.s32 1, %s8
  $region7: #{softmaxnet_forward.2} parent=0 // loop_footer_branch
    %7 = sbr.rel target = $region3
  $region8: #{softmaxnet_forward.2} parent=0 // loop_exit
    _

</llo_original>
